<compile_context>
chip_gen: v7x
topology: tpu7x:2x2x1
jax: 0.10.0
libtpu: 0.0.40
codegen_flags: <defaults>
</compile_context>

<pallas_src>
import jax
import jax.numpy as jnp
from jax.experimental import pallas as pl
from jax.experimental.pallas import tpu as pltpu


def rpp_kernel(a_ref, b_ref, x_ref, o_ref):
    """Elementwise hot path: sigmoid-gated residual combine.

    a_ref, b_ref: (1, TD)   gate parameters (pre-sigmoid)
    x_ref, o_ref: (TB, TD)  input / output tile
    """
    x = x_ref[...].astype(jnp.float32)
    a_gate = jax.nn.sigmoid(a_ref[...].astype(jnp.float32))  # (1, TD), broadcasts
    b_gate = jax.nn.sigmoid(b_ref[...].astype(jnp.float32))
    relu_x = jnp.maximum(x, 0.0)                              # nonLin = ReLU
    # TODO(synk): nn.Dropout is a no-op at inference; training-mode dropout not modeled.
    o_ref[...] = (a_gate * relu_x + b_gate * x).astype(o_ref.dtype)


def _round_up(x, m):
    return ((x + m - 1) // m) * m


def _pick_tile_d(D):
    """Feature-axis tile: full D unless D is a large multiple of 128."""
    if D % 128 != 0:
        return D  # (8,128) rule: last block dim must be full D if not 128-aligned
    # largest multiple-of-128 divisor of D that is <= 2048 (keeps blocks in VMEM
    # for very wide feature dims while staying lane-dense)
    for cand in range(2048, 127, -128):
        if D % cand == 0:
            return cand
    return D


def rpp_forward(x, a, b, *, tile_b=None, tile_d=None,
                vmem_limit_bytes=48 * 1024 * 1024):
    B, D = x.shape
    assert a.shape == (1, D) and b.shape == (1, D)

    if tile_d is None:
        tile_d = _pick_tile_d(D)
    assert D % tile_d == 0

    if tile_b is None:
        # ~4 MiB per block: large enough to approach the HBM roofline
        # (per-grid-step overhead ~0.35 us), small enough that double-buffered
        # x + out (4 block copies) fit v7x's 64 MiB VMEM with ample headroom.
        bytes_per_row = tile_d * jnp.dtype(x.dtype).itemsize
        tile_b = max(8, ((4 * 1024 * 1024) // bytes_per_row) // 8 * 8)
        tile_b = min(tile_b, 2048)
        tile_b = min(tile_b, _round_up(B, 8))
        if B > 8:
            # keep >= 2 grid steps along batch so both v7x TensorCores get work
            tile_b = min(tile_b, _round_up(pl.cdiv(B, 2), 8))
    assert tile_b % 8 == 0

    # Ragged batch: pad in the wrapper so the tile choice is decoupled from B.
    grid_b = pl.cdiv(B, tile_b)
    grid_d = D // tile_d
    B_pad = grid_b * tile_b
    x_in = x if B_pad == B else jnp.pad(x, ((0, B_pad - B), (0, 0)))

    out = pl.pallas_call(
        rpp_kernel,
        out_shape=jax.ShapeDtypeStruct((B_pad, D), x.dtype),
        grid_spec=pltpu.PrefetchScalarGridSpec(
            num_scalar_prefetch=0,
            grid=(grid_b, grid_d),
            in_specs=[
                pl.BlockSpec((1, tile_d), lambda i, j: (0, j)),       # a
                pl.BlockSpec((1, tile_d), lambda i, j: (0, j)),       # b
                pl.BlockSpec((tile_b, tile_d), lambda i, j: (i, j)),  # x
            ],
            out_specs=pl.BlockSpec((tile_b, tile_d), lambda i, j: (i, j)),
        ),
        compiler_params=pltpu.CompilerParams(
            dimension_semantics=("parallel", "parallel"),
            vmem_limit_bytes=vmem_limit_bytes,
        ),
    )(a, b, x_in)

    return out if B_pad == B else out[:B]


def _reference(x, a, b):
    xf = x.astype(jnp.float32)
    return (jax.nn.sigmoid(a.astype(jnp.float32)) * jnp.maximum(xf, 0.0)
            + jax.nn.sigmoid(b.astype(jnp.float32)) * xf)


if __name__ == "__main__":
    key = jax.random.PRNGKey(0)

    # --- Case 1: module-default-style shapes, params as Rpp.initialize() (zeros) ---
    batch, input_size = 8, 128
    k0, k1, k2, k3 = jax.random.split(key, 4)
    x = jax.random.normal(k0, (batch, input_size), dtype=jnp.float32)
    a = jnp.zeros((1, input_size), dtype=jnp.float32)
    b = jnp.zeros((1, input_size), dtype=jnp.float32)

    out = jax.block_until_ready(rpp_forward(x, a, b))
    ref = _reference(x, a, b)
    assert out.shape == (batch, input_size)
    assert jnp.allclose(out, ref, atol=1e-6, rtol=1e-6)

    # --- Case 2: non-divisible batch + nonzero gates (exercises padding / 2-step grid) ---
    batch2, d2 = 300, 256
    x2 = jax.random.normal(k1, (batch2, d2), dtype=jnp.float32)
    a2 = 0.1 * jax.random.normal(k2, (1, d2), dtype=jnp.float32)
    b2 = 0.1 * jax.random.normal(k3, (1, d2), dtype=jnp.float32)

    out2 = jax.block_until_ready(rpp_forward(x2, a2, b2))
    ref2 = _reference(x2, a2, b2)
    assert out2.shape == (batch2, d2)
    assert jnp.allclose(out2, ref2, atol=1e-5, rtol=1e-5)

    # --- Case 3: bf16 I/O (halves HBM traffic; compute stays f32 inside the kernel) ---
    x3 = x2.astype(jnp.bfloat16)
    out3 = jax.block_until_ready(rpp_forward(x3, a2, b2))
    ref3 = _reference(x3, a2, b2)
    assert out3.dtype == jnp.bfloat16
    assert jnp.allclose(out3.astype(jnp.float32), ref3, atol=2e-2, rtol=2e-2)

    print("KERNEL_OK")
</pallas_src>

<mosaic_0001>
module attributes {stable_mosaic.version = 11 : i64} {
  func.func @rpp_kernel(%arg0: i32, %arg1: i32, %arg2: memref<1x128xf32, #tpu.memory_space<vmem>>, %arg3: memref<1x128xf32, #tpu.memory_space<vmem>>, %arg4: memref<8x128xf32, #tpu.memory_space<vmem>>, %arg5: memref<8x128xf32, #tpu.memory_space<vmem>>) attributes {dimension_semantics = [#tpu.dimension_semantics<parallel>, #tpu.dimension_semantics<parallel>], iteration_bounds = array<i64: 1, 1>, scalar_prefetch = 0 : i64, scratch_operands = 0 : i64, tpu.core_type = #tpu.core_type<tc>, window_params = [{transform_indices = @transform_0, window_bounds = array<i64: 1, 128>}, {transform_indices = @transform_1, window_bounds = array<i64: 1, 128>}, {transform_indices = @transform_2, window_bounds = array<i64: 8, 128>}, {transform_indices = @transform_3, window_bounds = array<i64: 8, 128>}]} {
    %c0 = arith.constant 0 : index
    %c0_0 = arith.constant 0 : index
    %0 = vector.load %arg4[%c0, %c0_0] : memref<8x128xf32, #tpu.memory_space<vmem>>, vector<8x128xf32>
    %c0_1 = arith.constant 0 : index
    %c0_2 = arith.constant 0 : index
    %1 = vector.load %arg2[%c0_1, %c0_2] : memref<1x128xf32, #tpu.memory_space<vmem>>, vector<1x128xf32>
    %2 = arith.negf %1 : vector<1x128xf32>
    %3 = math.exp %2 : vector<1x128xf32>
    %cst = arith.constant 1.000000e+00 : f32
    %4 = vector.broadcast %cst : f32 to vector<1x128xf32>
    %5 = arith.addf %4, %3 : vector<1x128xf32>
    %6 = arith.divf %4, %5 : vector<1x128xf32>
    %c0_3 = arith.constant 0 : index
    %c0_4 = arith.constant 0 : index
    %7 = vector.load %arg3[%c0_3, %c0_4] : memref<1x128xf32, #tpu.memory_space<vmem>>, vector<1x128xf32>
    %8 = arith.negf %7 : vector<1x128xf32>
    %9 = math.exp %8 : vector<1x128xf32>
    %cst_5 = arith.constant 1.000000e+00 : f32
    %10 = vector.broadcast %cst_5 : f32 to vector<1x128xf32>
    %11 = arith.addf %10, %9 : vector<1x128xf32>
    %12 = arith.divf %10, %11 : vector<1x128xf32>
    %cst_6 = arith.constant 0.000000e+00 : f32
    %13 = vector.broadcast %cst_6 : f32 to vector<8x128xf32>
    %14 = arith.maximumf %0, %13 : vector<8x128xf32>
    %15 = vector.broadcast %6 : vector<1x128xf32> to vector<8x128xf32>
    %16 = arith.mulf %15, %14 : vector<8x128xf32>
    %17 = vector.broadcast %12 : vector<1x128xf32> to vector<8x128xf32>
    %18 = arith.mulf %17, %0 : vector<8x128xf32>
    %19 = arith.addf %16, %18 : vector<8x128xf32>
    %c0_7 = arith.constant 0 : index
    %c0_8 = arith.constant 0 : index
    %20 = vector.load %arg5[%c0_7, %c0_8] : memref<8x128xf32, #tpu.memory_space<vmem>>, vector<8x128xf32>
    tpu.vector_store %arg5[%c0_7, %c0_8], %19 {strides = array<i32>} : memref<8x128xf32, #tpu.memory_space<vmem>>, vector<8x128xf32>,
    return
  }
  func.func @transform_0(%arg0: i32, %arg1: i32) -> (i32, i32) {
    %c0_i32 = arith.constant 0 : i32
    %c0_i32_0 = arith.constant 0 : i32
    return %c0_i32, %arg1 : i32, i32
  }
  func.func @transform_1(%arg0: i32, %arg1: i32) -> (i32, i32) {
    %c0_i32 = arith.constant 0 : i32
    %c0_i32_0 = arith.constant 0 : i32
    return %c0_i32, %arg1 : i32, i32
  }
  func.func @transform_2(%arg0: i32, %arg1: i32) -> (i32, i32) {
    %c0_i32 = arith.constant 0 : i32
    return %arg0, %arg1 : i32, i32
  }
  func.func @transform_3(%arg0: i32, %arg1: i32) -> (i32, i32) {
    %c0_i32 = arith.constant 0 : i32
    return %arg0, %arg1 : i32, i32
  }
}

</mosaic_0001>

<llo_original>
// kernel: tpu_custom_call.1
$region0: #{tpu_custom_call.1}
  #allocation0 [shape = 'u32[]', space=smem, size = 0x4, offset = 0x4, fixed_abs, tag = 'smem constant byte address 0x4 - core index']
  #allocation1 [shape = 'u32[144,128]{1,0:T(1,128)}', space=vmem, size = 0x12000, scoped, tag = 'internal scratch']
  %s0 = inlined_call_operand.hbm [shape: f32[1,128], index: 0, kind: input, shape index: {}]
  %s1 = inlined_call_operand.vmem [shape: f32[1,128], index: 1, kind: input, shape index: {}]
  %s2 = inlined_call_operand.hbm [shape: f32[8,128], index: 2, kind: input, shape index: {}]
  %s3 = inlined_call_operand.hbm [shape: f32[8,128], index: 3, kind: output, shape index: {}]
  %s4 = sld [smem:[#allocation0]]
  $region30: #{tpu_custom_call.1} parent=0
    _
  %s6 = ssub.s32 1, %s4
  %s7 = scalar_select 0, %s6, %s4
  $region1: #{tpu_custom_call.1} parent=0
    #allocation2 [shape = 'u8[512]{0}', space=vmem, size = 0x400, scoped, tag = 'input window, operand 0, single buffered']
    #allocation3 [shape = 's32[1]{0}', space=sflag, size = 0x4, scoped, tag = 'scoped memory for tpu_custom_call.1']
    #allocation4 [shape = 's32[1]{0}', space=sflag, size = 0x4, scoped, tag = 'scoped memory for tpu_custom_call.1']
    #allocation5 [shape = 'u8[4096]{0}', space=vmem, size = 0x1000, scoped, tag = 'input window, operand 2, single buffered']
    #allocation6 [shape = 's32[1]{0}', space=sflag, size = 0x4, scoped, tag = 'scoped memory for tpu_custom_call.1']
    #allocation7 [shape = 'u8[4096]{0}', space=vmem, size = 0x1000, scoped, tag = 'output window, operand 0, single buffered']
    %8 = vsyncpa [#allocation3], 0
    %9 = vsyncpa [#allocation6], 0
    %10 = vsyncpa [#allocation4], 0
    // Predicated region
    $region2: #{tpu_custom_call.1} parent=1 // pred_check
      _
    $region3: #{tpu_custom_call.1} parent=1 // pred_check_branch
      %12 = sbr.rel (0) target = $region5
    $region4: #{tpu_custom_call.1} parent=1 // pred_region
      %s14 = ssub.s32 16, 16
      %15 = vsyncadd [#allocation3], %s14
      %s17 = sshll.u32 [#allocation2], 4
      %s18 = int_to_ptr.vmem [resolvable:$true] %s17
      %20 = dma.hbm_to_vmem [thread:$0]  %s0, 16, %s18, [#allocation3]
    $region5: #{tpu_custom_call.1} parent=1 // pred_fallthru
      _
    // Predicated region
    $region6: #{tpu_custom_call.1} parent=1 // pred_check
      _
    $region7: #{tpu_custom_call.1} parent=1 // pred_check_branch
      %22 = sbr.rel (0) target = $region9
    $region8: #{tpu_custom_call.1} parent=1 // pred_region
      _
    $region9: #{tpu_custom_call.1} parent=1 // pred_fallthru
      _
    // Predicated region
    $region10: #{tpu_custom_call.1} parent=1 // pred_check
      _
    $region11: #{tpu_custom_call.1} parent=1 // pred_check_branch
      %24 = sbr.rel (0) target = $region13
    $region12: #{tpu_custom_call.1} parent=1 // pred_region
      %s26 = ssub.s32 128, 128
      %27 = vsyncadd [#allocation6], %s26
      %s29 = sshll.u32 [#allocation5], 4
      %s30 = int_to_ptr.vmem [resolvable:$true] %s29
      %32 = dma.hbm_to_vmem [thread:$0]  %s2, 128, %s30, [#allocation6]
    $region13: #{tpu_custom_call.1} parent=1 // pred_fallthru
      _
    // Predicated region
    $region14: #{tpu_custom_call.1} parent=1 // pred_check
      _
    $region15: #{tpu_custom_call.1} parent=1 // pred_check_branch
      %34 = sbr.rel (0) target = $region17
    $region16: #{tpu_custom_call.1} parent=1 // pred_region
      %35 = dma.done [#allocation3], 16
    $region17: #{tpu_custom_call.1} parent=1 // pred_fallthru
      _
    // Predicated region
    $region18: #{tpu_custom_call.1} parent=1 // pred_check
      _
    $region19: #{tpu_custom_call.1} parent=1 // pred_check_branch
      %37 = sbr.rel (0) target = $region21
    $region20: #{tpu_custom_call.1} parent=1 // pred_region
      %38 = dma.done [#allocation6], 128
    $region21: #{tpu_custom_call.1} parent=1 // pred_fallthru
      _
    %v39 = vld [vmem:[#allocation5] sm:$0xff]
    %v40 = vld [vmem:[#allocation2] sm:$0x1]
    %v41 = vxor.u32 %v40, 2147483648
    %v42 = vmul.f32 %v41, 1.442695
    %v43 = vpow.pop %v42
    %v44 = vadd.f32 %v43, 1.0
    %v45 = vrcp.pop %v44
    %v46 = vmul.f32 1.0, %v45
    %v47 = vld [vmem:[%s1] sm:$0x1]
    %v48 = vxor.u32 %v47, 2147483648
    %v49 = vmul.f32 %v48, 1.442695
    %v50 = vpow.pop %v49
    %v51 = vadd.f32 %v50, 1.0
    %v52 = vrcp.pop %v51
    %v53 = vmul.f32 1.0, %v52
    %v54 = vmax.f32 %v39, 0.0
    %v56 = vlaneseq
    %v57 = vshrl.u32 %v56, 7
    %v58 = vsub.s32 0, %v57
    %v59 = vrot.slane %v46, %v58
    %v61 = vmul.f32 %v59, %v54
    %v63 = vlaneseq
    %v64 = vshrl.u32 %v63, 7
    %v65 = vsub.s32 0, %v64
    %v66 = vrot.slane %v53, %v65
    %v68 = vmul.f32 %v66, %v39
    %v69 = vadd.f32 %v61, %v68
    %70 = vst [vmem:[#allocation7] sm:$0xff] %v69
    // Predicated region
    $region22: #{tpu_custom_call.1} parent=1 // pred_check
      _
    $region23: #{tpu_custom_call.1} parent=1 // pred_check_branch
      %72 = sbr.rel (0) target = $region25
    $region24: #{tpu_custom_call.1} parent=1 // pred_region
      %s74 = ssub.s32 128, 128
      %75 = vsyncadd [#allocation4], %s74
      %s77 = sshll.u32 [#allocation7], 4
      %s78 = int_to_ptr.vmem [resolvable:$true] %s77
      %80 = dma.vmem_to_hbm [thread:$0]  %s78, 128, %s3, [#allocation4]
    $region25: #{tpu_custom_call.1} parent=1 // pred_fallthru
      _
    // Predicated region
    $region26: #{tpu_custom_call.1} parent=1 // pred_check
      _
    $region27: #{tpu_custom_call.1} parent=1 // pred_check_branch
      %82 = sbr.rel (0) target = $region29
    $region28: #{tpu_custom_call.1} parent=1 // pred_region
      %83 = dma.done [#allocation4], 128
    $region29: #{tpu_custom_call.1} parent=1 // pred_fallthru
      _
    %84 = vsyncpa [#allocation3], 1
    %85 = vsyncpa [#allocation6], 1
    %86 = vsyncpa [#allocation4], 1

</llo_original>
